<compile_context>
chip_gen: v6e
topology: v6e:2x2x1
jax: 0.10.0
libtpu: 0.0.40
codegen_flags: <defaults>
</compile_context>

<pallas_src>
import functools

import jax
import jax.numpy as jnp
from jax.experimental import pallas as pl
from jax.experimental.pallas import tpu as pltpu


def _round_up(x, m):
    return ((x + m - 1) // m) * m


def actor_kernel(state_ref, bias_ref, w1_ref, w2_ref, w3_ref, out_ref,
                 *, hidden_dim, action_dim, max_action):
    # state_ref: (state_dim, block_b) f32 -- batch on the 128-lane axis.
    x = state_ref[...]

    # --- LayerNorm stats over the feature (sublane) axis; eps=1e-5, biased
    #     variance. Affine (ln_w, ln_b) is folded into W1/b1 offline. ---
    mean = jnp.mean(x, axis=0, keepdims=True)
    xc = x - mean
    var = jnp.mean(xc * xc, axis=0, keepdims=True)
    xn = xc * jax.lax.rsqrt(var + 1e-5)

    # Packed per-output-channel bias columns; static slices are cheap views.
    b1 = bias_ref[0:hidden_dim, 0:1]   # (hidden, 1)  -- LN bias folded in
    b2 = bias_ref[0:hidden_dim, 1:2]   # (hidden, 1)
    b3 = bias_ref[0:action_dim, 2:3]   # (action, 1)

    # --- l1 + relu   (W @ x; lane-dense (hidden, block_b) activations) ---
    a = jnp.dot(w1_ref[...], xn, preferred_element_type=jnp.float32) + b1
    a = jnp.maximum(a, 0.0)

    # --- l2 + relu ---
    a = jnp.dot(w2_ref[...], a, preferred_element_type=jnp.float32) + b2
    a = jnp.maximum(a, 0.0)

    # --- l4 + tanh, scale by compile-time max_action (tanh/rsqrt go to EUP) ---
    a = jnp.dot(w3_ref[...], a, preferred_element_type=jnp.float32) + b3
    out_ref[...] = max_action * jnp.tanh(a)


def actor_forward(state, kparams, max_action, *, max_block_b=4096, min_blocks=1):
    """state: (B, state_dim) -> (B, action_dim). kparams from prepare_kernel_params."""
    B, state_dim = state.shape
    w1f = kparams["w1f"]           # (hidden, state_dim), LN scale folded in
    w2t = kparams["w2t"]           # (hidden, hidden)
    w3t = kparams["w3t"]           # (action, hidden)
    biases = kparams["biases"]     # (max(hidden, action), 3)
    hidden_dim = w1f.shape[0]
    action_dim = w3t.shape[0]

    # Few, large batch tiles; pad B up to a multiple of the tile so ragged
    # batches never degenerate into many tiny grid steps.
    block_b = min(max_block_b, _round_up(B, 128))
    if min_blocks > 1:
        # v7x: keep >= min_blocks parallel grid blocks so both TCs get work.
        block_b = min(block_b, _round_up(pl.cdiv(B, min_blocks), 128))
    b_padded = _round_up(B, block_b)
    grid = (b_padded // block_b,)

    # Lane-dense layout plumbing (batch on the lane axis). Padded columns are
    # zero; LN of a zero column stays zero, so no NaN/Inf leaks into the pad.
    state_t = jnp.transpose(state.astype(jnp.float32))          # (state_dim, B)
    if b_padded != B:
        state_t = jnp.pad(state_t, ((0, 0), (0, b_padded - B)))

    kernel = functools.partial(
        actor_kernel,
        hidden_dim=hidden_dim,
        action_dim=action_dim,
        max_action=float(max_action),
    )

    out_t = pl.pallas_call(
        kernel,
        out_shape=jax.ShapeDtypeStruct((action_dim, b_padded), jnp.float32),
        grid_spec=pltpu.PrefetchScalarGridSpec(
            num_scalar_prefetch=0,
            grid=grid,
            in_specs=[
                # state tile marches over the batch (lane) axis ...
                pl.BlockSpec((state_dim, block_b), lambda i: (0, i)),
                # ... everything else stays resident (DMA'd once).
                pl.BlockSpec(biases.shape, lambda i: (0, 0)),
                pl.BlockSpec(w1f.shape, lambda i: (0, 0)),
                pl.BlockSpec(w2t.shape, lambda i: (0, 0)),
                pl.BlockSpec(w3t.shape, lambda i: (0, 0)),
            ],
            out_specs=pl.BlockSpec((action_dim, block_b), lambda i: (0, i)),
        ),
        compiler_params=pltpu.CompilerParams(
            dimension_semantics=("parallel",),
        ),
    )(state_t, biases, w1f, w2t, w3t)

    return jnp.transpose(out_t[:, :B])                           # (B, action_dim)


def init_params(key, state_dim, hidden_dim, action_dim):
    """Logical (nn.Module-shaped) parameters: w* are (in_dim, out_dim)."""
    ks = jax.random.split(key, 5)

    def lin(k, fan_in, fan_out):
        bound = 1.0 / jnp.sqrt(fan_in)
        kw, kb = jax.random.split(k)
        w = jax.random.uniform(kw, (fan_in, fan_out), jnp.float32, -bound, bound)
        b = jax.random.uniform(kb, (1, fan_out), jnp.float32, -bound, bound)
        return w, b

    w1, b1 = lin(ks[0], state_dim, hidden_dim)
    w2, b2 = lin(ks[1], hidden_dim, hidden_dim)
    w3, b3 = lin(ks[2], hidden_dim, action_dim)

    # Non-trivial LN affine so the offline fold is actually exercised.
    ln_w = 1.0 + 0.1 * jax.random.normal(ks[3], (1, state_dim), jnp.float32)
    ln_b = 0.1 * jax.random.normal(ks[4], (1, state_dim), jnp.float32)

    return {"ln_w": ln_w, "ln_b": ln_b,
            "w1": w1, "b1": b1, "w2": w2, "b2": b2, "w3": w3, "b3": b3}


def prepare_kernel_params(params):
    """Offline: fold LN affine into layer 1, transpose weights to (out, in),
    and pack the three bias vectors into one small (max_dim, 3) column slab."""
    w1, b1 = params["w1"], params["b1"]
    w2, b2 = params["w2"], params["b2"]
    w3, b3 = params["w3"], params["b3"]
    ln_w, ln_b = params["ln_w"], params["ln_b"]

    state_dim, hidden_dim = w1.shape
    action_dim = w3.shape[1]

    # Exact algebraic fold:  (xn * ln_w + ln_b) @ W1 + b1
    #                      =  xn @ (diag(ln_w) @ W1) + (ln_b @ W1 + b1)
    w1f = jnp.transpose(ln_w.reshape(state_dim, 1) * w1)    # (hidden, state_dim)
    b1f = (ln_b @ w1 + b1)                                   # (1, hidden)

    pack_rows = max(hidden_dim, action_dim)

    def col(v):
        v = v.reshape(-1, 1)
        return jnp.pad(v, ((0, pack_rows - v.shape[0]), (0, 0)))

    biases = jnp.concatenate([col(b1f), col(b2), col(b3)], axis=1)  # (rows, 3)

    return {
        "w1f": w1f,
        "w2t": jnp.transpose(w2),       # (hidden, hidden)
        "w3t": jnp.transpose(w3),       # (action, hidden)
        "biases": biases,
    }


def actor_reference(state, params, max_action):
    """Pure-JAX reference on the *unfolded* logical params."""
    x = state.astype(jnp.float32)
    mean = jnp.mean(x, axis=-1, keepdims=True)
    var = jnp.mean((x - mean) ** 2, axis=-1, keepdims=True)
    xn = (x - mean) / jnp.sqrt(var + 1e-5) * params["ln_w"] + params["ln_b"]
    a = jnp.maximum(xn @ params["w1"] + params["b1"], 0.0)
    a = jnp.maximum(a @ params["w2"] + params["b2"], 0.0)
    return max_action * jnp.tanh(a @ params["w3"] + params["b3"])


if __name__ == "__main__":
    key = jax.random.PRNGKey(0)
    k_state, k_params = jax.random.split(key)

    batch = 8
    state_dim = 16
    hidden_dim = 32
    action_dim = 4
    max_action = 2.0

    state = jax.random.normal(k_state, (batch, state_dim), jnp.float32)
    params = init_params(k_params, state_dim, hidden_dim, action_dim)
    kparams = prepare_kernel_params(params)

    out = actor_forward(state, kparams, max_action)
    out = jax.block_until_ready(out)

    ref = actor_reference(state, params, max_action)
    assert out.shape == (batch, action_dim)
    assert jnp.allclose(out, ref, atol=1e-4, rtol=1e-4), "mismatch vs reference"

    print("KERNEL_OK")
</pallas_src>

<mosaic_0001>
module attributes {stable_mosaic.version = 11 : i64} {
  func.func @actor_kernel(%arg0: i32, %arg1: memref<16x128xf32, #tpu.memory_space<vmem>>, %arg2: memref<32x3xf32, #tpu.memory_space<vmem>>, %arg3: memref<32x16xf32, #tpu.memory_space<vmem>>, %arg4: memref<32x32xf32, #tpu.memory_space<vmem>>, %arg5: memref<4x32xf32, #tpu.memory_space<vmem>>, %arg6: memref<4x128xf32, #tpu.memory_space<vmem>>) attributes {dimension_semantics = [#tpu.dimension_semantics<parallel>], iteration_bounds = array<i64: 1>, scalar_prefetch = 0 : i64, scratch_operands = 0 : i64, tpu.core_type = #tpu.core_type<tc>, window_params = [{transform_indices = @transform_0, window_bounds = array<i64: 16, 128>}, {pipeline_mode = #tpu.pipeline_mode<synchronous>, transform_indices = @transform_1, window_bounds = array<i64: 32, 3>}, {pipeline_mode = #tpu.pipeline_mode<synchronous>, transform_indices = @transform_2, window_bounds = array<i64: 32, 16>}, {pipeline_mode = #tpu.pipeline_mode<synchronous>, transform_indices = @transform_3, window_bounds = array<i64: 32, 32>}, {pipeline_mode = #tpu.pipeline_mode<synchronous>, transform_indices = @transform_4, window_bounds = array<i64: 4, 32>}, {transform_indices = @transform_5, window_bounds = array<i64: 4, 128>}]} {
    %c0 = arith.constant 0 : index
    %c0_0 = arith.constant 0 : index
    %0 = vector.load %arg1[%c0, %c0_0] : memref<16x128xf32, #tpu.memory_space<vmem>>, vector<16x128xf32>
    %cst = arith.constant dense<0.000000e+00> : vector<128xf32>
    %1 = vector.multi_reduction <add>, %0, %cst [0] : vector<16x128xf32> to vector<128xf32>
    %2 = vector.shape_cast %1 : vector<128xf32> to vector<1x128xf32>
    %cst_1 = arith.constant 1.600000e+01 : f32
    %3 = vector.broadcast %cst_1 : f32 to vector<1x128xf32>
    %4 = arith.divf %2, %3 : vector<1x128xf32>
    %5 = vector.broadcast %4 : vector<1x128xf32> to vector<16x128xf32>
    %6 = arith.subf %0, %5 : vector<16x128xf32>
    %7 = arith.mulf %6, %6 : vector<16x128xf32>
    %cst_2 = arith.constant dense<0.000000e+00> : vector<128xf32>
    %8 = vector.multi_reduction <add>, %7, %cst_2 [0] : vector<16x128xf32> to vector<128xf32>
    %9 = vector.shape_cast %8 : vector<128xf32> to vector<1x128xf32>
    %cst_3 = arith.constant 1.600000e+01 : f32
    %10 = vector.broadcast %cst_3 : f32 to vector<1x128xf32>
    %11 = arith.divf %9, %10 : vector<1x128xf32>
    %cst_4 = arith.constant 9.99999974E-6 : f32
    %12 = vector.broadcast %cst_4 : f32 to vector<1x128xf32>
    %13 = arith.addf %11, %12 : vector<1x128xf32>
    %14 = math.rsqrt %13 : vector<1x128xf32>
    %15 = vector.broadcast %14 : vector<1x128xf32> to vector<16x128xf32>
    %16 = arith.mulf %6, %15 : vector<16x128xf32>
    %c0_5 = arith.constant 0 : index
    %c0_6 = arith.constant 0 : index
    %17 = vector.load %arg2[%c0_5, %c0_6] : memref<32x3xf32, #tpu.memory_space<vmem>>, vector<32x1xf32>
    %c0_7 = arith.constant 0 : index
    %c1 = arith.constant 1 : index
    %18 = vector.load %arg2[%c0_7, %c1] : memref<32x3xf32, #tpu.memory_space<vmem>>, vector<32x1xf32>
    %c0_8 = arith.constant 0 : index
    %c2 = arith.constant 2 : index
    %19 = vector.load %arg2[%c0_8, %c2] : memref<32x3xf32, #tpu.memory_space<vmem>>, vector<4x1xf32>
    %c0_9 = arith.constant 0 : index
    %c0_10 = arith.constant 0 : index
    %20 = vector.load %arg3[%c0_9, %c0_10] : memref<32x16xf32, #tpu.memory_space<vmem>>, vector<32x16xf32>
    %cst_11 = arith.constant dense<0.000000e+00> : vector<32x128xf32>
    %21 = tpu.matmul %20, %16, %cst_11 {dimension_numbers = #tpu.dot_dimension_numbers<[1], [0], [0], [1], [0, 0, 1, 1], [], []>} : vector<32x16xf32>, vector<16x128xf32>, vector<32x128xf32> -> vector<32x128xf32>
    %22 = vector.broadcast %17 : vector<32x1xf32> to vector<32x128xf32>
    %23 = arith.addf %21, %22 : vector<32x128xf32>
    %cst_12 = arith.constant 0.000000e+00 : f32
    %24 = vector.broadcast %cst_12 : f32 to vector<32x128xf32>
    %25 = arith.maximumf %23, %24 : vector<32x128xf32>
    %c0_13 = arith.constant 0 : index
    %c0_14 = arith.constant 0 : index
    %26 = vector.load %arg4[%c0_13, %c0_14] : memref<32x32xf32, #tpu.memory_space<vmem>>, vector<32x32xf32>
    %cst_15 = arith.constant dense<0.000000e+00> : vector<32x128xf32>
    %27 = tpu.matmul %26, %25, %cst_15 {dimension_numbers = #tpu.dot_dimension_numbers<[1], [0], [0], [1], [0, 0, 1, 1], [], []>} : vector<32x32xf32>, vector<32x128xf32>, vector<32x128xf32> -> vector<32x128xf32>
    %28 = vector.broadcast %18 : vector<32x1xf32> to vector<32x128xf32>
    %29 = arith.addf %27, %28 : vector<32x128xf32>
    %cst_16 = arith.constant 0.000000e+00 : f32
    %30 = vector.broadcast %cst_16 : f32 to vector<32x128xf32>
    %31 = arith.maximumf %29, %30 : vector<32x128xf32>
    %c0_17 = arith.constant 0 : index
    %c0_18 = arith.constant 0 : index
    %32 = vector.load %arg5[%c0_17, %c0_18] : memref<4x32xf32, #tpu.memory_space<vmem>>, vector<4x32xf32>
    %cst_19 = arith.constant dense<0.000000e+00> : vector<4x128xf32>
    %33 = tpu.matmul %32, %31, %cst_19 {dimension_numbers = #tpu.dot_dimension_numbers<[1], [0], [0], [1], [0, 0, 1, 1], [], []>} : vector<4x32xf32>, vector<32x128xf32>, vector<4x128xf32> -> vector<4x128xf32>
    %34 = vector.broadcast %19 : vector<4x1xf32> to vector<4x128xf32>
    %35 = arith.addf %33, %34 : vector<4x128xf32>
    %36 = math.tanh %35 : vector<4x128xf32>
    %cst_20 = arith.constant 2.000000e+00 : f32
    %37 = vector.broadcast %cst_20 : f32 to vector<4x128xf32>
    %38 = arith.mulf %37, %36 : vector<4x128xf32>
    %c0_21 = arith.constant 0 : index
    %c0_22 = arith.constant 0 : index
    %39 = vector.load %arg6[%c0_21, %c0_22] : memref<4x128xf32, #tpu.memory_space<vmem>>, vector<4x128xf32>
    tpu.vector_store %arg6[%c0_21, %c0_22], %38 {strides = array<i32>} : memref<4x128xf32, #tpu.memory_space<vmem>>, vector<4x128xf32>,
    return
  }
  func.func @transform_0(%arg0: i32) -> (i32, i32) {
    %c0_i32 = arith.constant 0 : i32
    %c0_i32_0 = arith.constant 0 : i32
    return %c0_i32, %arg0 : i32, i32
  }
  func.func @transform_1(%arg0: i32) -> (i32, i32) {
    %c0_i32 = arith.constant 0 : i32
    %c0_i32_0 = arith.constant 0 : i32
    %c0_i32_1 = arith.constant 0 : i32
    return %c0_i32, %c0_i32_0 : i32, i32
  }
  func.func @transform_2(%arg0: i32) -> (i32, i32) {
    %c0_i32 = arith.constant 0 : i32
    %c0_i32_0 = arith.constant 0 : i32
    %c0_i32_1 = arith.constant 0 : i32
    return %c0_i32, %c0_i32_0 : i32, i32
  }
  func.func @transform_3(%arg0: i32) -> (i32, i32) {
    %c0_i32 = arith.constant 0 : i32
    %c0_i32_0 = arith.constant 0 : i32
    %c0_i32_1 = arith.constant 0 : i32
    return %c0_i32, %c0_i32_0 : i32, i32
  }
  func.func @transform_4(%arg0: i32) -> (i32, i32) {
    %c0_i32 = arith.constant 0 : i32
    %c0_i32_0 = arith.constant 0 : i32
    %c0_i32_1 = arith.constant 0 : i32
    return %c0_i32, %c0_i32_0 : i32, i32
  }
  func.func @transform_5(%arg0: i32) -> (i32, i32) {
    %c0_i32 = arith.constant 0 : i32
    %c0_i32_0 = arith.constant 0 : i32
    return %c0_i32, %arg0 : i32, i32
  }
}

</mosaic_0001>

<llo_original>
// kernel: tpu_custom_call.1
$region0: #{tpu_custom_call.1}
  #allocation0 [shape = 'u32[]', space=smem, size = 0x4, offset = 0x4, fixed_abs, tag = 'smem constant byte address 0x4 - core index']
  #allocation1 [shape = 'u32[144,128]{1,0:T(1,128)}', space=vmem, size = 0x12000, scoped, tag = 'internal scratch']
  %s0 = inlined_call_operand.vmem [shape: f32[16,128], index: 0, kind: input, shape index: {}]
  %s1 = inlined_call_operand.vmem [shape: f32[32,3], index: 1, kind: input, shape index: {}]
  %s2 = inlined_call_operand.vmem [shape: f32[32,16], index: 2, kind: input, shape index: {}]
  %s3 = inlined_call_operand.vmem [shape: f32[32,32], index: 3, kind: input, shape index: {}]
  %s4 = inlined_call_operand.vmem [shape: f32[4,32], index: 4, kind: input, shape index: {}]
  %s5 = inlined_call_operand.hbm [shape: f32[4,128], index: 5, kind: output, shape index: {}]
  %s6 = sld [smem:[#allocation0]]
  $region30: #{tpu_custom_call.1} parent=0
    _
  %s8 = ssub.s32 1, %s6
  %s9 = scalar_select 0, %s8, %s6
  $region1: #{tpu_custom_call.1} parent=0
    #allocation2 [shape = 'u8[2048]{0}', space=vmem, size = 0x800, scoped, tag = 'output window, operand 0, single buffered']
    #allocation3 [shape = 's32[1]{0}', space=sflag, size = 0x4, scoped, tag = 'scoped memory for tpu_custom_call.1']
    %10 = vsyncpa [#allocation3], 0
    // Predicated region
    $region2: #{tpu_custom_call.1} parent=1 // pred_check
      _
    $region3: #{tpu_custom_call.1} parent=1 // pred_check_branch
      %12 = sbr.rel (0) target = $region5
    $region4: #{tpu_custom_call.1} parent=1 // pred_region
      _
    $region5: #{tpu_custom_call.1} parent=1 // pred_fallthru
      _
    // Predicated region
    $region6: #{tpu_custom_call.1} parent=1 // pred_check
      _
    $region7: #{tpu_custom_call.1} parent=1 // pred_check_branch
      %14 = sbr.rel (0) target = $region9
    $region8: #{tpu_custom_call.1} parent=1 // pred_region
      _
    $region9: #{tpu_custom_call.1} parent=1 // pred_fallthru
      _
    // Predicated region
    $region10: #{tpu_custom_call.1} parent=1 // pred_check
      _
    $region11: #{tpu_custom_call.1} parent=1 // pred_check_branch
      %16 = sbr.rel (0) target = $region13
    $region12: #{tpu_custom_call.1} parent=1 // pred_region
      _
    $region13: #{tpu_custom_call.1} parent=1 // pred_fallthru
      _
    // Predicated region
    $region14: #{tpu_custom_call.1} parent=1 // pred_check
      _
    $region15: #{tpu_custom_call.1} parent=1 // pred_check_branch
      %18 = sbr.rel (0) target = $region17
    $region16: #{tpu_custom_call.1} parent=1 // pred_region
      _
    $region17: #{tpu_custom_call.1} parent=1 // pred_fallthru
      _
    // Predicated region
    $region18: #{tpu_custom_call.1} parent=1 // pred_check
      _
    $region19: #{tpu_custom_call.1} parent=1 // pred_check_branch
      %20 = sbr.rel (0) target = $region21
    $region20: #{tpu_custom_call.1} parent=1 // pred_region
      _
    $region21: #{tpu_custom_call.1} parent=1 // pred_fallthru
      _
    %v21 = vld [vmem:[%s0] sm:$0xff]
    %v22 = vld [vmem:[%s0 + $0x8] sm:$0xff]
    %v23 = vadd.f32 %v21, %v22
    %v24 = vrot.slane %v23, 4
    %v25 = vadd.f32 %v23, %v24
    %v26 = vrot.slane %v25, 2
    %v27 = vadd.f32 %v25, %v26
    %v28 = vrot.slane %v27, 1
    %v29 = vadd.f32 %v27, %v28
    %v30 = vrcp.pop 16.0
    %v31 = vmul.f32 %v29, %v30
    %v32 = vsub.f32 %v21, %v31
    %v33 = vsub.f32 %v22, %v31
    %v34 = vmul.f32 %v32, %v32
    %v35 = vmul.f32 %v33, %v33
    %v36 = vadd.f32 %v34, %v35
    %v37 = vrot.slane %v36, 4
    %v38 = vadd.f32 %v36, %v37
    %v39 = vrot.slane %v38, 2
    %v40 = vadd.f32 %v38, %v39
    %v41 = vrot.slane %v40, 1
    %v42 = vadd.f32 %v40, %v41
    %v43 = vmul.f32 %v42, %v30
    %v44 = vadd.f32 %v43, 1e-05
    %v45 = vrsqrt.pop %v44
    %v46 = vmul.f32 %v32, %v45
    %v47 = vmul.f32 %v33, %v45
    %v48 = vld [vmem:[%s1] sm:$0xff]
    %v49 = vld [vmem:[%s1 + $0x8] sm:$0xff]
    %v50 = vld [vmem:[%s1 + $0x10] sm:$0xff]
    %v51 = vld [vmem:[%s1 + $0x18] sm:$0xff]
    %v52 = vld [vmem:[%s1] sm:$0xf]
    %v53 = vld [vmem:[%s2] sm:$0xff]
    %v54 = vld [vmem:[%s2 + $0x8] sm:$0xff]
    %v55 = vld [vmem:[%s2 + $0x10] sm:$0xff]
    %v56 = vld [vmem:[%s2 + $0x18] sm:$0xff]
    %58 = vset.pattern.permute.xlu0 0
    %59 = vperm.xlu0 %58, %v48
    %v60 = vpop.permute.xlu0 %59
    %63 = vset.pattern.permute.xlu0 0
    %64 = vperm.xlu0 %63, %v49
    %v65 = vpop.permute.xlu0 %64
    %68 = vset.pattern.permute.xlu0 0
    %69 = vperm.xlu0 %68, %v50
    %v70 = vpop.permute.xlu0 %69
    %73 = vset.pattern.permute.xlu0 0
    %74 = vperm.xlu0 %73, %v51
    %v75 = vpop.permute.xlu0 %74
    %vm77 = vcmask 130048
    %v79 = vsel %vm77, %v53, 0
    %v82 = vsel %vm77, %v54, 0
    %v85 = vsel %vm77, %v55, 0
    %v88 = vsel %vm77, %v56, 0
    %90 = vmatprep.subr.mxu0 0.0
    %91 = vmatpush1.msra.mxu0 0.0
    %92 = vmatprep.subr.mxu0 0.0
    %93 = vmatpush1.msra.mxu0 0.0
    %94 = vmatprep.subr.mxu0 0.0
    %95 = vmatpush1.msra.mxu0 0.0
    %96 = vmatprep.subr.mxu0 0.0
    %97 = vmatpush1.msra.mxu0 0.0
    %98 = vmatprep.subr.mxu0 0.0
    %99 = vmatpush1.msra.mxu0 0.0
    %100 = vmatprep.subr.mxu0 0.0
    %101 = vmatpush1.msra.mxu0 0.0
    %102 = vmatprep.subr.mxu0 0.0
    %103 = vmatpush1.msra.mxu0 0.0
    %104 = vmatprep.subr.mxu0 0.0
    %105 = vmatpush1.msra.mxu0 0.0
    %106 = vmatprep.subr.mxu0 0.0
    %107 = vmatpush1.msra.mxu0 0.0
    %108 = vmatprep.subr.mxu0 0.0
    %109 = vmatpush1.msra.mxu0 0.0
    %110 = vmatprep.subr.mxu0 0.0
    %111 = vmatpush1.msra.mxu0 0.0
    %112 = vmatprep.subr.mxu0 0.0
    %113 = vmatpush1.msra.mxu0 0.0
    %114 = vmatprep.subr.mxu0 0.0
    %115 = vmatpush1.msra.mxu0 0.0
    %116 = vmatprep.subr.mxu0 0.0
    %117 = vmatpush1.msra.mxu0 0.0
    %118 = vmatprep.subr.mxu0 0.0
    %119 = vmatpush1.msra.mxu0 %v47
    %120 = vmatprep.subr.mxu0 0.0
    %121 = vmatpush1.msra.mxu0 %v46
    %122 = vmatprep.subr.mxu0 0.0
    %123 = vmatpush2.msra.mxu0 0.0
    %124 = vmatprep.subr.mxu0 0.0
    %125 = vmatpush2.msra.mxu0 0.0
    %126 = vmatprep.subr.mxu0 0.0
    %127 = vmatpush2.msra.mxu0 0.0
    %128 = vmatprep.subr.mxu0 0.0
    %129 = vmatpush2.msra.mxu0 0.0
    %130 = vmatprep.subr.mxu0 0.0
    %131 = vmatpush2.msra.mxu0 0.0
    %132 = vmatprep.subr.mxu0 0.0
    %133 = vmatpush2.msra.mxu0 0.0
    %134 = vmatprep.subr.mxu0 0.0
    %135 = vmatpush2.msra.mxu0 0.0
    %136 = vmatprep.subr.mxu0 0.0
    %137 = vmatpush2.msra.mxu0 0.0
    %138 = vmatprep.subr.mxu0 0.0
    %139 = vmatpush2.msra.mxu0 0.0
    %140 = vmatprep.subr.mxu0 0.0
    %141 = vmatpush2.msra.mxu0 0.0
    %142 = vmatprep.subr.mxu0 0.0
    %143 = vmatpush2.msra.mxu0 0.0
    %144 = vmatprep.subr.mxu0 0.0
    %145 = vmatpush2.msra.mxu0 0.0
    %146 = vmatprep.subr.mxu0 0.0
    %147 = vmatpush2.msra.mxu0 0.0
    %148 = vmatprep.subr.mxu0 0.0
    %149 = vmatpush2.msra.mxu0 0.0
    %150 = vmatprep.subr.mxu0 0.0
    %151 = vmatpush2.msra.mxu0 0.0
    %152 = vmatprep.subr.mxu0 0.0
    %153 = vmatpush2.msra.mxu0 0.0
    %154 = vmatprep.mubr.f32.mxu0 0.0
    %155 = vmatmul.mubr.f32.gmra.mxu0 %v79
    %v156 = vpop.f32.mrf.mxu0
    %v157 = vadd.f32 %v60, %v156
    %v158 = vpop.f32.mrf.mxu0
    %159 = vmatprep.mubr.f32.mxu0 0.0
    %160 = vmatmul.mubr.f32.gmra.mxu0 %v82
    %v161 = vpop.f32.mrf.mxu0
    %v162 = vadd.f32 %v65, %v161
    %v163 = vpop.f32.mrf.mxu0
    %164 = vmatprep.mubr.f32.mxu0 0.0
    %165 = vmatmul.mubr.f32.gmra.mxu0 %v85
    %v166 = vpop.f32.mrf.mxu0
    %v167 = vadd.f32 %v70, %v166
    %v168 = vpop.f32.mrf.mxu0
    %169 = vmatprep.mubr.f32.mxu0 0.0
    %170 = vmatmul.mubr.f32.gmra.mxu0 %v88
    %v171 = vpop.f32.mrf.mxu0
    %v172 = vadd.f32 %v75, %v171
    %v173 = vpop.f32.mrf.mxu0
    %174 = vdwg.mxu0
    %v175 = vmax.f32 %v157, 0.0
    %v176 = vmax.f32 %v162, 0.0
    %v177 = vmax.f32 %v167, 0.0
    %v178 = vmax.f32 %v172, 0.0
    %v179 = vld [vmem:[%s3] sm:$0xff]
    %v180 = vld [vmem:[%s3 + $0x8] sm:$0xff]
    %v181 = vld [vmem:[%s3 + $0x10] sm:$0xff]
    %v182 = vld [vmem:[%s3 + $0x18] sm:$0xff]
    %183 = vset.pattern.permute.xlu0 1
    %184 = vperm.xlu0 %183, %v48
    %v185 = vpop.permute.xlu0 %184
    %187 = vset.pattern.permute.xlu0 1
    %188 = vperm.xlu0 %187, %v49
    %v189 = vpop.permute.xlu0 %188
    %191 = vset.pattern.permute.xlu0 1
    %192 = vperm.xlu0 %191, %v50
    %v193 = vpop.permute.xlu0 %192
    %195 = vset.pattern.permute.xlu0 1
    %196 = vperm.xlu0 %195, %v51
    %v197 = vpop.permute.xlu0 %196
    %vm199 = vcmask 261120
    %v201 = vsel %vm199, %v179, 0
    %v204 = vsel %vm199, %v180, 0
    %v207 = vsel %vm199, %v181, 0
    %v210 = vsel %vm199, %v182, 0
    %212 = vmatprep.subr.mxu0 0.0
    %213 = vmatpush1.msra.mxu0 0.0
    %214 = vmatprep.subr.mxu0 0.0
    %215 = vmatpush1.msra.mxu0 0.0
    %216 = vmatprep.subr.mxu0 0.0
    %217 = vmatpush1.msra.mxu0 0.0
    %218 = vmatprep.subr.mxu0 0.0
    %219 = vmatpush1.msra.mxu0 0.0
    %220 = vmatprep.subr.mxu0 0.0
    %221 = vmatpush1.msra.mxu0 0.0
    %222 = vmatprep.subr.mxu0 0.0
    %223 = vmatpush1.msra.mxu0 0.0
    %224 = vmatprep.subr.mxu0 0.0
    %225 = vmatpush1.msra.mxu0 0.0
    %226 = vmatprep.subr.mxu0 0.0
    %227 = vmatpush1.msra.mxu0 0.0
    %228 = vmatprep.subr.mxu0 0.0
    %229 = vmatpush1.msra.mxu0 0.0
    %230 = vmatprep.subr.mxu0 0.0
    %231 = vmatpush1.msra.mxu0 0.0
    %232 = vmatprep.subr.mxu0 0.0
    %233 = vmatpush1.msra.mxu0 0.0
    %234 = vmatprep.subr.mxu0 0.0
    %235 = vmatpush1.msra.mxu0 0.0
    %236 = vmatprep.subr.mxu0 0.0
    %237 = vmatpush1.msra.mxu0 %v178
    %238 = vmatprep.subr.mxu0 0.0
    %239 = vmatpush1.msra.mxu0 %v177
    %240 = vmatprep.subr.mxu0 0.0
    %241 = vmatpush1.msra.mxu0 %v176
    %242 = vmatprep.subr.mxu0 0.0
    %243 = vmatpush1.msra.mxu0 %v175
    %244 = vmatprep.subr.mxu0 0.0
    %245 = vmatpush2.msra.mxu0 0.0
    %246 = vmatprep.subr.mxu0 0.0
    %247 = vmatpush2.msra.mxu0 0.0
    %248 = vmatprep.subr.mxu0 0.0
    %249 = vmatpush2.msra.mxu0 0.0
    %250 = vmatprep.subr.mxu0 0.0
    %251 = vmatpush2.msra.mxu0 0.0
    %252 = vmatprep.subr.mxu0 0.0
    %253 = vmatpush2.msra.mxu0 0.0
    %254 = vmatprep.subr.mxu0 0.0
    %255 = vmatpush2.msra.mxu0 0.0
    %256 = vmatprep.subr.mxu0 0.0
    %257 = vmatpush2.msra.mxu0 0.0
    %258 = vmatprep.subr.mxu0 0.0
    %259 = vmatpush2.msra.mxu0 0.0
    %260 = vmatprep.subr.mxu0 0.0
    %261 = vmatpush2.msra.mxu0 0.0
    %262 = vmatprep.subr.mxu0 0.0
    %263 = vmatpush2.msra.mxu0 0.0
    %264 = vmatprep.subr.mxu0 0.0
    %265 = vmatpush2.msra.mxu0 0.0
    %266 = vmatprep.subr.mxu0 0.0
    %267 = vmatpush2.msra.mxu0 0.0
    %268 = vmatprep.subr.mxu0 0.0
    %269 = vmatpush2.msra.mxu0 0.0
    %270 = vmatprep.subr.mxu0 0.0
    %271 = vmatpush2.msra.mxu0 0.0
    %272 = vmatprep.subr.mxu0 0.0
    %273 = vmatpush2.msra.mxu0 0.0
    %274 = vmatprep.subr.mxu0 0.0
    %275 = vmatpush2.msra.mxu0 0.0
    %276 = vmatprep.mubr.f32.mxu0 0.0
    %277 = vmatmul.mubr.f32.gmra.mxu0 %v201
    %v278 = vpop.f32.mrf.mxu0
    %v279 = vadd.f32 %v185, %v278
    %v280 = vpop.f32.mrf.mxu0
    %281 = vmatprep.mubr.f32.mxu0 0.0
    %282 = vmatmul.mubr.f32.gmra.mxu0 %v204
    %v283 = vpop.f32.mrf.mxu0
    %v284 = vadd.f32 %v189, %v283
    %v285 = vpop.f32.mrf.mxu0
    %286 = vmatprep.mubr.f32.mxu0 0.0
    %287 = vmatmul.mubr.f32.gmra.mxu0 %v207
    %v288 = vpop.f32.mrf.mxu0
    %v289 = vadd.f32 %v193, %v288
    %v290 = vpop.f32.mrf.mxu0
    %291 = vmatprep.mubr.f32.mxu0 0.0
    %292 = vmatmul.mubr.f32.gmra.mxu0 %v210
    %v293 = vpop.f32.mrf.mxu0
    %v294 = vadd.f32 %v197, %v293
    %v295 = vpop.f32.mrf.mxu0
    %296 = vdwg.mxu0
    %v297 = vmax.f32 %v279, 0.0
    %v298 = vmax.f32 %v284, 0.0
    %v299 = vmax.f32 %v289, 0.0
    %v300 = vmax.f32 %v294, 0.0
    %v301 = vld [vmem:[%s4] sm:$0xf]
    %303 = vset.pattern.permute.xlu0 2
    %304 = vperm.xlu0 %303, %v52
    %v305 = vpop.permute.xlu0 %304
    %v308 = vsel %vm199, %v301, 0
    %310 = vmatprep.subr.mxu0 0.0
    %311 = vmatpush1.msra.mxu0 0.0
    %312 = vmatprep.subr.mxu0 0.0
    %313 = vmatpush1.msra.mxu0 0.0
    %314 = vmatprep.subr.mxu0 0.0
    %315 = vmatpush1.msra.mxu0 0.0
    %316 = vmatprep.subr.mxu0 0.0
    %317 = vmatpush1.msra.mxu0 0.0
    %318 = vmatprep.subr.mxu0 0.0
    %319 = vmatpush1.msra.mxu0 0.0
    %320 = vmatprep.subr.mxu0 0.0
    %321 = vmatpush1.msra.mxu0 0.0
    %322 = vmatprep.subr.mxu0 0.0
    %323 = vmatpush1.msra.mxu0 0.0
    %324 = vmatprep.subr.mxu0 0.0
    %325 = vmatpush1.msra.mxu0 0.0
    %326 = vmatprep.subr.mxu0 0.0
    %327 = vmatpush1.msra.mxu0 0.0
    %328 = vmatprep.subr.mxu0 0.0
    %329 = vmatpush1.msra.mxu0 0.0
    %330 = vmatprep.subr.mxu0 0.0
    %331 = vmatpush1.msra.mxu0 0.0
    %332 = vmatprep.subr.mxu0 0.0
    %333 = vmatpush1.msra.mxu0 0.0
    %334 = vmatprep.subr.mxu0 0.0
    %335 = vmatpush1.msra.mxu0 %v300
    %336 = vmatprep.subr.mxu0 0.0
    %337 = vmatpush1.msra.mxu0 %v299
    %338 = vmatprep.subr.mxu0 0.0
    %339 = vmatpush1.msra.mxu0 %v298
    %340 = vmatprep.subr.mxu0 0.0
    %341 = vmatpush1.msra.mxu0 %v297
    %342 = vmatprep.subr.mxu0 0.0
    %343 = vmatpush2.msra.mxu0 0.0
    %344 = vmatprep.subr.mxu0 0.0
    %345 = vmatpush2.msra.mxu0 0.0
    %346 = vmatprep.subr.mxu0 0.0
    %347 = vmatpush2.msra.mxu0 0.0
    %348 = vmatprep.subr.mxu0 0.0
    %349 = vmatpush2.msra.mxu0 0.0
    %350 = vmatprep.subr.mxu0 0.0
    %351 = vmatpush2.msra.mxu0 0.0
    %352 = vmatprep.subr.mxu0 0.0
    %353 = vmatpush2.msra.mxu0 0.0
    %354 = vmatprep.subr.mxu0 0.0
    %355 = vmatpush2.msra.mxu0 0.0
    %356 = vmatprep.subr.mxu0 0.0
    %357 = vmatpush2.msra.mxu0 0.0
    %358 = vmatprep.subr.mxu0 0.0
    %359 = vmatpush2.msra.mxu0 0.0
    %360 = vmatprep.subr.mxu0 0.0
    %361 = vmatpush2.msra.mxu0 0.0
    %362 = vmatprep.subr.mxu0 0.0
    %363 = vmatpush2.msra.mxu0 0.0
    %364 = vmatprep.subr.mxu0 0.0
    %365 = vmatpush2.msra.mxu0 0.0
    %366 = vmatprep.subr.mxu0 0.0
    %367 = vmatpush2.msra.mxu0 0.0
    %368 = vmatprep.subr.mxu0 0.0
    %369 = vmatpush2.msra.mxu0 0.0
    %370 = vmatprep.subr.mxu0 0.0
    %371 = vmatpush2.msra.mxu0 0.0
    %372 = vmatprep.subr.mxu0 0.0
    %373 = vmatpush2.msra.mxu0 0.0
    %374 = vmatprep.mubr.f32.mxu0 0.0
    %375 = vmatmul.mubr.f32.gmra.mxu0 %v308
    %v376 = vpop.f32.mrf.mxu0
    %v377 = vadd.f32 %v305, %v376
    %v378 = vpop.f32.mrf.mxu0
    %379 = vdwg.mxu0
    %v380 = vtanh.pop %v377
    %v381 = vmul.f32 %v380, 2.0
    %382 = vst [vmem:[#allocation2] sm:$0xf] %v381
    // Predicated region
    $region22: #{tpu_custom_call.1} parent=1 // pred_check
      _
    $region23: #{tpu_custom_call.1} parent=1 // pred_check_branch
      %384 = sbr.rel (0) target = $region25
    $region24: #{tpu_custom_call.1} parent=1 // pred_region
      %s386 = ssub.s32 64, 64
      %387 = vsyncadd [#allocation3], %s386
      %s389 = sshll.u32 [#allocation2], 4
      %s390 = int_to_ptr.vmem [resolvable:$true] %s389
      %392 = dma.vmem_to_hbm [thread:$0]  %s390, 64, %s5, [#allocation3]
    $region25: #{tpu_custom_call.1} parent=1 // pred_fallthru
      _
    // Predicated region
    $region26: #{tpu_custom_call.1} parent=1 // pred_check
      _
    $region27: #{tpu_custom_call.1} parent=1 // pred_check_branch
      %394 = sbr.rel (0) target = $region29
    $region28: #{tpu_custom_call.1} parent=1 // pred_region
      %395 = dma.done [#allocation3], 64
    $region29: #{tpu_custom_call.1} parent=1 // pred_fallthru
      _
    %396 = vsyncpa [#allocation3], 1

</llo_original>
